<compile_context>
chip_gen: v7x
topology: tpu7x:2x2x1
jax: 0.10.0
libtpu: 0.0.40
codegen_flags: <defaults>
</compile_context>

<pallas_src>
import jax
import jax.numpy as jnp
from jax.experimental import pallas as pl
from jax.experimental.pallas import tpu as pltpu


def _round_up(x, m):
    return ((x + m - 1) // m) * m


def _tpu_vmem_capacity():
    try:
        info = pltpu.get_tpu_info()
        cap = int(getattr(info, "vmem_capacity_bytes"))
        if cap > 0:
            return cap
    except Exception:
        pass
    return 64 * 1024 * 1024  # conservative default (v7x per-TC VMEM)


def _pick_batch_tile(batch, target):
    """Sublane-aligned batch tile; prefer an even tile count (v7x: 2 TCs)."""
    b8 = _round_up(batch, 8)
    tb = min(_round_up(target, 8), b8)
    n_tiles = -(-b8 // tb)
    if n_tiles > 1 and n_tiles % 2 == 1:
        tb_alt = _round_up(-(-b8 // (n_tiles + 1)), 8)
        if tb_alt >= 8:
            tb = tb_alt
    return tb


def logreg_kernel(x_ref, w_ref, b_ref, o_ref):
    # grid = (batch tiles, V tiles); V is the trailing reduction axis.
    k = pl.program_id(1)
    tv = x_ref.shape[1]

    @pl.when(k == 0)
    def _init():
        o_ref[...] = jnp.zeros_like(o_ref)

    # Resident weight [2, V_pad] (lane-dense along V): slice the current tile.
    start = pl.multiple_of(k * tv, tv)
    w_tile = w_ref[:, pl.ds(start, tv)]

    # x tile (TB, TV) contracted with weight tile (2, TV) along V -> (TB, 2),
    # accumulated directly into the VMEM-resident f32 output tile.
    o_ref[...] += jax.lax.dot_general(
        x_ref[...], w_tile,
        dimension_numbers=(((1,), (1,)), ((), ())),
        preferred_element_type=jnp.float32,
    )

    @pl.when(k == pl.num_programs(1) - 1)
    def _finalize():
        acc = o_ref[...]
        # bias (2 scalars in SMEM) added exactly once, after the full reduction.
        col = jax.lax.broadcasted_iota(jnp.int32, acc.shape, 1)
        logits = acc + jnp.where(col == 0, b_ref[0], b_ref[1])
        # log(sigmoid(z)) = min(z, 0) - log1p(exp(-|z|))   (matches F.logsigmoid)
        o_ref[...] = jnp.minimum(logits, 0.0) - jnp.log1p(jnp.exp(-jnp.abs(logits)))


def logreg_forward(x, weight, bias, *, tb_target=1024, tv_target=None):
    """x: [B, V] f32, weight: [2, V] f32 (nn.Linear layout), bias: [2] f32."""
    B, V = x.shape
    assert weight.shape == (2, V) and bias.shape == (2,)

    vmem_cap = _tpu_vmem_capacity()
    if tv_target is None:
        # ~16 MiB x tiles on 64 MiB-VMEM parts (v7x), up to 32 MiB on 128 MiB parts.
        tv_target = 4096 if vmem_cap <= 64 * 1024 * 1024 else 8192

    # Tile sizes (sublane / lane aligned); shapes are padded, never fallen back.
    TB = _pick_batch_tile(B, tb_target)
    TV = min(_round_up(tv_target, 128), _round_up(V, 128))

    B_pad = _round_up(B, TB)
    V_pad = _round_up(V, TV)

    # Zero-pad: padded V columns of x and weight are zero -> contribute nothing
    # to the reduction; padded batch rows are sliced off afterwards.
    if (B_pad, V_pad) != (B, V):
        x = jnp.pad(x, ((0, B_pad - B), (0, V_pad - V)))
    if V_pad != V:
        weight = jnp.pad(weight, ((0, 0), (0, V_pad - V)))

    grid = (B_pad // TB, V_pad // TV)

    # Real double-buffered VMEM footprint + headroom, capped below physical VMEM.
    est = (2 * TB * TV * 4          # x (double-buffered)
           + 2 * 8 * V_pad * 4      # resident weight (sublane-padded 2 -> 8)
           + 2 * TB * 128 * 4)      # output tile (lane-padded, double-buffered)
    vmem_limit = int(min(max(est + (4 << 20), 8 << 20), int(0.75 * vmem_cap)))

    grid_spec = pltpu.PrefetchScalarGridSpec(
        num_scalar_prefetch=0,
        grid=grid,
        in_specs=[
            pl.BlockSpec((TB, TV), lambda i, k: (i, k)),           # x (streamed)
            pl.BlockSpec((2, V_pad), lambda i, k: (0, 0)),         # weight (resident)
            pl.BlockSpec(memory_space=pltpu.MemorySpace.SMEM),     # bias (2,)
        ],
        out_specs=pl.BlockSpec((TB, 2), lambda i, k: (i, 0)),
    )

    out = pl.pallas_call(
        logreg_kernel,
        out_shape=jax.ShapeDtypeStruct((B_pad, 2), jnp.float32),
        grid_spec=grid_spec,
        compiler_params=pltpu.CompilerParams(
            dimension_semantics=("parallel", "arbitrary"),
            vmem_limit_bytes=vmem_limit,
        ),
        cost_estimate=pl.CostEstimate(
            flops=4 * B * V,                                   # 2*B*V MACs, 2 classes
            bytes_accessed=4 * (B * V + 2 * V + 2 + 2 * B),
            transcendentals=4 * B,
        ),
    )(x, weight, bias)

    return out[:B] if B_pad != B else out


def logreg_reference(x, weight, bias):
    return jax.nn.log_sigmoid(x @ weight.T + bias)


if __name__ == "__main__":
    key = jax.random.PRNGKey(0)
    k_x, k_w, k_b = jax.random.split(key, 3)

    batch = 8
    vocab_size = 32

    x = jax.random.normal(k_x, (batch, vocab_size), dtype=jnp.float32)
    # deterministic init mimicking nn.Linear uniform(-1/sqrt(V), 1/sqrt(V))
    bound = 1.0 / jnp.sqrt(jnp.float32(vocab_size))
    weight = jax.random.uniform(k_w, (2, vocab_size), dtype=jnp.float32,
                                minval=-bound, maxval=bound)
    bias = jax.random.uniform(k_b, (2,), dtype=jnp.float32,
                              minval=-bound, maxval=bound)

    out = logreg_forward(x, weight, bias)
    out = jax.block_until_ready(out)

    ref = logreg_reference(x, weight, bias)
    assert out.shape == (batch, 2)
    assert out.dtype == jnp.float32
    assert jnp.allclose(out, ref, atol=1e-5, rtol=1e-5), "mismatch vs reference"

    print("KERNEL_OK")
</pallas_src>

<mosaic_0001>
module attributes {stable_mosaic.version = 11 : i64} {
  func.func @logreg_kernel(%arg0: i32, %arg1: i32, %arg2: memref<8x128xf32, #tpu.memory_space<vmem>>, %arg3: memref<2x128xf32, #tpu.memory_space<vmem>>, %arg4: memref<2xf32, #tpu.memory_space<smem>>, %arg5: memref<8x2xf32, #tpu.memory_space<vmem>>) attributes {dimension_semantics = [#tpu.dimension_semantics<parallel>, #tpu.dimension_semantics<arbitrary>], iteration_bounds = array<i64: 1, 1>, scalar_prefetch = 0 : i64, scratch_operands = 0 : i64, tpu.core_type = #tpu.core_type<tc>, window_params = [{transform_indices = @transform_0, window_bounds = array<i64: 8, 128>}, {pipeline_mode = #tpu.pipeline_mode<synchronous>, transform_indices = @transform_1, window_bounds = array<i64: 2, 128>}, {transform_indices = @transform_2, window_bounds = array<i64: 2>}, {transform_indices = @transform_3, window_bounds = array<i64: 8, 2>}]} {
    %c0_i32 = arith.constant 0 : i32
    %0 = arith.cmpi eq, %arg1, %c0_i32 : i32
    %1 = arith.extui %0 : i1 to i32
    %c0_i32_0 = arith.constant 0 : i32
    %2 = arith.cmpi ne, %1, %c0_i32_0 : i32
    scf.if %2 {
      %cst_9 = arith.constant 0.000000e+00 : f32
      %15 = vector.broadcast %cst_9 : f32 to vector<8x2xf32>
      %c0_10 = arith.constant 0 : index
      %c0_11 = arith.constant 0 : index
      %16 = vector.load %arg5[%c0_10, %c0_11] : memref<8x2xf32, #tpu.memory_space<vmem>>, vector<8x2xf32>
      tpu.vector_store %arg5[%c0_10, %c0_11], %15 {strides = array<i32>} : memref<8x2xf32, #tpu.memory_space<vmem>>, vector<8x2xf32>,
    } else {
    }
    %c128_i32 = arith.constant 128 : i32
    %3 = arith.muli %arg1, %c128_i32 : i32
    %4 = tpu.assume_multiple %3, 128 : i32
    %c0 = arith.constant 0 : index
    %5 = arith.index_cast %4 : i32 to index
    %6 = vector.load %arg3[%c0, %5] : memref<2x128xf32, #tpu.memory_space<vmem>>, vector<2x128xf32>
    %c0_1 = arith.constant 0 : index
    %c0_2 = arith.constant 0 : index
    %7 = vector.load %arg5[%c0_1, %c0_2] : memref<8x2xf32, #tpu.memory_space<vmem>>, vector<8x2xf32>
    %c0_3 = arith.constant 0 : index
    %c0_4 = arith.constant 0 : index
    %8 = vector.load %arg2[%c0_3, %c0_4] : memref<8x128xf32, #tpu.memory_space<vmem>>, vector<8x128xf32>
    %cst = arith.constant dense<0.000000e+00> : vector<8x2xf32>
    %9 = tpu.matmul %8, %6, %cst {dimension_numbers = #tpu.dot_dimension_numbers<[1], [1], [0], [0], [0, 0, 1, 0], [], []>} : vector<8x128xf32>, vector<2x128xf32>, vector<8x2xf32> -> vector<8x2xf32>
    %10 = arith.addf %7, %9 : vector<8x2xf32>
    %c0_5 = arith.constant 0 : index
    %c0_6 = arith.constant 0 : index
    %11 = vector.load %arg5[%c0_5, %c0_6] : memref<8x2xf32, #tpu.memory_space<vmem>>, vector<8x2xf32>
    tpu.vector_store %arg5[%c0_5, %c0_6], %10 {strides = array<i32>} : memref<8x2xf32, #tpu.memory_space<vmem>>, vector<8x2xf32>,
    %c0_i32_7 = arith.constant 0 : i32
    %12 = arith.cmpi eq, %arg1, %c0_i32_7 : i32
    %13 = arith.extui %12 : i1 to i32
    %c0_i32_8 = arith.constant 0 : i32
    %14 = arith.cmpi ne, %13, %c0_i32_8 : i32
    scf.if %14 {
      %c0_9 = arith.constant 0 : index
      %c0_10 = arith.constant 0 : index
      %15 = vector.load %arg5[%c0_9, %c0_10] : memref<8x2xf32, #tpu.memory_space<vmem>>, vector<8x2xf32>
      %16 = tpu.iota {dimensions = array<i32: 1>} : vector<8x2xi32>
      %c0_i32_11 = arith.constant 0 : i32
      %17 = vector.broadcast %c0_i32_11 : i32 to vector<8x2xi32>
      %18 = arith.cmpi eq, %16, %17 : vector<8x2xi32>
      %c0_12 = arith.constant 0 : index
      %19 = memref.load %arg4[%c0_12] : memref<2xf32, #tpu.memory_space<smem>>
      %c1 = arith.constant 1 : index
      %20 = memref.load %arg4[%c1] : memref<2xf32, #tpu.memory_space<smem>>
      %21 = vector.broadcast %19 : f32 to vector<8x2xf32>
      %22 = vector.broadcast %20 : f32 to vector<8x2xf32>
      %23 = arith.select %18, %21, %22 : vector<8x2xi1>, vector<8x2xf32>
      %24 = arith.addf %15, %23 : vector<8x2xf32>
      %cst_13 = arith.constant 0.000000e+00 : f32
      %25 = vector.broadcast %cst_13 : f32 to vector<8x2xf32>
      %26 = arith.minimumf %24, %25 : vector<8x2xf32>
      %27 = math.absf %24 : vector<8x2xf32>
      %cst_14 = arith.constant 0.000000e+00 : f32
      %28 = vector.broadcast %cst_14 : f32 to vector<8x2xf32>
      %29 = arith.subf %28, %27 : vector<8x2xf32>
      %30 = math.exp %29 : vector<8x2xf32>
      %31 = math.log1p %30 : vector<8x2xf32>
      %32 = arith.subf %26, %31 : vector<8x2xf32>
      %c0_15 = arith.constant 0 : index
      %c0_16 = arith.constant 0 : index
      %33 = vector.load %arg5[%c0_15, %c0_16] : memref<8x2xf32, #tpu.memory_space<vmem>>, vector<8x2xf32>
      tpu.vector_store %arg5[%c0_15, %c0_16], %32 {strides = array<i32>} : memref<8x2xf32, #tpu.memory_space<vmem>>, vector<8x2xf32>,
    } else {
    }
    return
  }
  func.func @transform_0(%arg0: i32, %arg1: i32) -> (i32, i32) {
    %c0_i32 = arith.constant 0 : i32
    return %arg0, %arg1 : i32, i32
  }
  func.func @transform_1(%arg0: i32, %arg1: i32) -> (i32, i32) {
    %c0_i32 = arith.constant 0 : i32
    %c0_i32_0 = arith.constant 0 : i32
    %c0_i32_1 = arith.constant 0 : i32
    return %c0_i32, %c0_i32_0 : i32, i32
  }
  func.func @transform_2(%arg0: i32, %arg1: i32) -> i32 {
    %c0_i32 = arith.constant 0 : i32
    %c0_i32_0 = arith.constant 0 : i32
    return %c0_i32 : i32
  }
  func.func @transform_3(%arg0: i32, %arg1: i32) -> (i32, i32) {
    %c0_i32 = arith.constant 0 : i32
    %c0_i32_0 = arith.constant 0 : i32
    return %arg0, %c0_i32 : i32, i32
  }
}

</mosaic_0001>

<llo_original>
// kernel: tpu_custom_call.1
$region0: #{tpu_custom_call.1}
  #allocation0 [shape = 'u32[]', space=smem, size = 0x4, offset = 0x4, fixed_abs, tag = 'smem constant byte address 0x4 - core index']
  #allocation1 [shape = 'u32[144,128]{1,0:T(1,128)}', space=vmem, size = 0x12000, scoped, tag = 'internal scratch']
  %s0 = inlined_call_operand.hbm [shape: f32[8,128], index: 0, kind: input, shape index: {}]
  %s1 = inlined_call_operand.vmem [shape: f32[2,128], index: 1, kind: input, shape index: {}]
  %s2 = inlined_call_operand.vmem [shape: f32[2], index: 2, kind: input, shape index: {}]
  %s3 = inlined_call_operand.vmem [shape: f32[8,2], index: 3, kind: output, shape index: {}]
  %s4 = sld [smem:[#allocation0]]
  $region38: #{tpu_custom_call.1} parent=0
    _
  %s6 = ssub.s32 1, %s4
  %s7 = scalar_select 0, %s6, %s4
  $region1: #{tpu_custom_call.1} parent=0
    #allocation2 [shape = 'u8[4096]{0}', space=vmem, size = 0x1000, scoped, tag = 'input window, operand 0, single buffered']
    #allocation3 [shape = 's32[1]{0}', space=sflag, size = 0x4, scoped, tag = 'scoped memory for tpu_custom_call.1']
    #allocation4 [shape = 's32[1]{0}', space=sflag, size = 0x4, scoped, tag = 'scoped memory for tpu_custom_call.1']
    #allocation5 [shape = 'u8[512]{0}', space=smem, size = 0x200, scoped, tag = 'input window, operand 2, single buffered']
    %8 = vsyncpa [#allocation3], 0
    %9 = vsyncpa [#allocation4], 0
    // Predicated region
    $region2: #{tpu_custom_call.1} parent=1 // pred_check
      _
    $region3: #{tpu_custom_call.1} parent=1 // pred_check_branch
      %11 = sbr.rel (0) target = $region5
    $region4: #{tpu_custom_call.1} parent=1 // pred_region
      %s13 = ssub.s32 128, 128
      %14 = vsyncadd [#allocation3], %s13
      %s16 = sshll.u32 [#allocation2], 4
      %s17 = int_to_ptr.vmem [resolvable:$true] %s16
      %19 = dma.hbm_to_vmem [thread:$0]  %s0, 128, %s17, [#allocation3]
    $region5: #{tpu_custom_call.1} parent=1 // pred_fallthru
      _
    // Predicated region
    $region6: #{tpu_custom_call.1} parent=1 // pred_check
      _
    $region7: #{tpu_custom_call.1} parent=1 // pred_check_branch
      %21 = sbr.rel (0) target = $region9
    $region8: #{tpu_custom_call.1} parent=1 // pred_region
      _
    $region9: #{tpu_custom_call.1} parent=1 // pred_fallthru
      _
    // Predicated region
    $region10: #{tpu_custom_call.1} parent=1 // pred_check
      _
    $region11: #{tpu_custom_call.1} parent=1 // pred_check_branch
      %23 = sbr.rel (0) target = $region13
    $region12: #{tpu_custom_call.1} parent=1 // pred_region
      %s25 = ssub.s32 16, 16
      %26 = vsyncadd [#allocation4], %s25
      %s28 = sshll.u32 %s2, 4
      %s29 = int_to_ptr.vmem [resolvable:$true] %s28
      %31 = dma.vmem_to_smem %s29, 16, [#allocation5], [#allocation4]
    $region13: #{tpu_custom_call.1} parent=1 // pred_fallthru
      _
    // Predicated region
    $region14: #{tpu_custom_call.1} parent=1 // pred_check
      _
    $region15: #{tpu_custom_call.1} parent=1 // pred_check_branch
      %33 = sbr.rel (0) target = $region17
    $region16: #{tpu_custom_call.1} parent=1 // pred_region
      %34 = dma.done [#allocation3], 128
    $region17: #{tpu_custom_call.1} parent=1 // pred_fallthru
      _
    // Predicated region
    $region18: #{tpu_custom_call.1} parent=1 // pred_check
      _
    $region19: #{tpu_custom_call.1} parent=1 // pred_check_branch
      %36 = sbr.rel (0) target = $region21
    $region20: #{tpu_custom_call.1} parent=1 // pred_region
      %37 = dma.done [#allocation4], 16
    $region21: #{tpu_custom_call.1} parent=1 // pred_fallthru
      _
    %38 = sfence
    %p39 = scmp.eq.s32.totalorder 0, 0
    // Predicated region
    $region22: #{tpu_custom_call.1} parent=1 // pred_check
      %p40 = pneg %p39
    $region23: #{tpu_custom_call.1} parent=1 // pred_check_branch
      %42 = sbr.rel (%p40) target = $region25
    $region24: #{tpu_custom_call.1} parent=1 // pred_region
      %vm43 = vcmask 15360
      %44 = vst.msk [vmem:[%s3] sm:$0xff] %vm43, 0.0
    $region25: #{tpu_custom_call.1} parent=1 // pred_fallthru
      _
    %s45 = smul.u32 0, 128
    %s46 = sshra.s32 %s45, 7
    %s47 = sand.u32 %s45, 127
    %s48 = scalar_lea.vmem %s1, %s46
    %v49 = vld [vmem:[%s48] sm:$0x3]
    %v50 = vld [vmem:[%s3] sm:$0xff]
    %v51 = vld [vmem:[#allocation2] sm:$0xff]
    %52 = vmatprep.subr.mxu0 0.0
    %53 = vmatpush1.xpose.msra.mxu0 %v49
    %54 = vmatprep.subr.mxu0 0.0
    %55 = vmatpush1.xpose.msra.mxu0 0.0
    %56 = vmatprep.subr.mxu0 0.0
    %57 = vmatpush1.xpose.msra.mxu0 0.0
    %58 = vmatprep.subr.mxu0 0.0
    %59 = vmatpush1.xpose.msra.mxu0 0.0
    %60 = vmatprep.subr.mxu0 0.0
    %61 = vmatpush1.xpose.msra.mxu0 0.0
    %62 = vmatprep.subr.mxu0 0.0
    %63 = vmatpush1.xpose.msra.mxu0 0.0
    %64 = vmatprep.subr.mxu0 0.0
    %65 = vmatpush1.xpose.msra.mxu0 0.0
    %66 = vmatprep.subr.mxu0 0.0
    %67 = vmatpush1.xpose.msra.mxu0 0.0
    %68 = vmatprep.subr.mxu0 0.0
    %69 = vmatpush1.xpose.msra.mxu0 0.0
    %70 = vmatprep.subr.mxu0 0.0
    %71 = vmatpush1.xpose.msra.mxu0 0.0
    %72 = vmatprep.subr.mxu0 0.0
    %73 = vmatpush1.xpose.msra.mxu0 0.0
    %74 = vmatprep.subr.mxu0 0.0
    %75 = vmatpush1.xpose.msra.mxu0 0.0
    %76 = vmatprep.subr.mxu0 0.0
    %77 = vmatpush1.xpose.msra.mxu0 0.0
    %78 = vmatprep.subr.mxu0 0.0
    %79 = vmatpush1.xpose.msra.mxu0 0.0
    %80 = vmatprep.subr.mxu0 0.0
    %81 = vmatpush1.xpose.msra.mxu0 0.0
    %82 = vmatprep.subr.mxu0 0.0
    %83 = vmatpush1.xpose.msra.mxu0 0.0
    %84 = vmatprep.subr.mxu0 0.0
    %85 = vmatpush1.xpose.msra.mxu0 0.0
    %86 = vmatprep.subr.mxu0 0.0
    %87 = vmatpush1.xpose.msra.mxu0 0.0
    %88 = vmatprep.subr.mxu0 0.0
    %89 = vmatpush1.xpose.msra.mxu0 0.0
    %90 = vmatprep.subr.mxu0 0.0
    %91 = vmatpush1.xpose.msra.mxu0 0.0
    %92 = vmatprep.subr.mxu0 0.0
    %93 = vmatpush1.xpose.msra.mxu0 0.0
    %94 = vmatprep.subr.mxu0 0.0
    %95 = vmatpush1.xpose.msra.mxu0 0.0
    %96 = vmatprep.subr.mxu0 0.0
    %97 = vmatpush1.xpose.msra.mxu0 0.0
    %98 = vmatprep.subr.mxu0 0.0
    %99 = vmatpush1.xpose.msra.mxu0 0.0
    %100 = vmatprep.subr.mxu0 0.0
    %101 = vmatpush1.xpose.msra.mxu0 0.0
    %102 = vmatprep.subr.mxu0 0.0
    %103 = vmatpush1.xpose.msra.mxu0 0.0
    %104 = vmatprep.subr.mxu0 0.0
    %105 = vmatpush1.xpose.msra.mxu0 0.0
    %106 = vmatprep.subr.mxu0 0.0
    %107 = vmatpush1.xpose.msra.mxu0 0.0
    %108 = vmatprep.subr.mxu0 0.0
    %109 = vmatpush1.xpose.msra.mxu0 0.0
    %110 = vmatprep.subr.mxu0 0.0
    %111 = vmatpush1.xpose.msra.mxu0 0.0
    %112 = vmatprep.subr.mxu0 0.0
    %113 = vmatpush1.xpose.msra.mxu0 0.0
    %114 = vmatprep.subr.mxu0 0.0
    %115 = vmatpush1.xpose.msra.mxu0 0.0
    %116 = vmatprep.mubr.f32.mxu0 0.0
    %117 = vmatmul.mubr.f32.gmra.mrb[0].mxu0 %v51
    %v118 = vpop.f32.mrb[0].mxu0
    %v119 = vadd.f32 0.0, %v118
    %v120 = vpop.f32.mrb[0].mxu0
    %121 = vdwg.mxu0
    %v122 = vadd.f32 %v50, %v119
    %vm123 = vcmask 15360
    %124 = vst.msk [vmem:[%s3] sm:$0xff] %vm123, %v122
    // Predicated region
    $region26: #{tpu_custom_call.1} parent=1 // pred_check
      %p125 = pneg %p39
    $region27: #{tpu_custom_call.1} parent=1 // pred_check_branch
      %127 = sbr.rel (%p125) target = $region29
    $region28: #{tpu_custom_call.1} parent=1 // pred_region
      %v128 = vld [vmem:[%s3] sm:$0xff]
      %v129 = vlaneseq
      %v130 = vand.u32 %v129, 127
      %vm131 = vcmp.eq.s32.totalorder %v130, 0
      %s132 = sld [smem:[#allocation5]]
      %s133 = sld [smem:[#allocation5 + $0x1]]
      %v134 = vstv %s132
      %v135 = vstv %s133
      %v136 = vsel %vm131, %v134, %v135
      %v137 = vadd.f32 %v128, %v136
      %v138 = vmin.f32 %v137, 0.0
      %v139 = vand.u32 2147483647, %v137
      %v140 = vsub.f32 0.0, %v139
      %v141 = vmul.f32 %v140, 1.442695
      %v142 = vpow.pop %v141
      %v143 = vadd.f32 %v142, 1.0
      %v144 = vlog2.pop %v143
      %v145 = vmul.f32 %v144, 0.6931472
      %v146 = vmul.f32 -0.5, %v142
      %v147 = vadd.f32 %v146, 1.0
      %v148 = vmul.f32 %v147, %v142
      %v149 = vand.u32 2147483647, %v142
      %vm150 = vcmp.lt.f32.partialorder %v149, 0.0004427343
      %v151 = vsel %vm150, %v148, %v145
      %v152 = vsub.f32 %v138, %v151
      %153 = vst.msk [vmem:[%s3] sm:$0xff] %vm123, %v152
    $region29: #{tpu_custom_call.1} parent=1 // pred_fallthru
      _
    // Predicated region
    $region30: #{tpu_custom_call.1} parent=1 // pred_check
      _
    $region31: #{tpu_custom_call.1} parent=1 // pred_check_branch
      %155 = sbr.rel (0) target = $region33
    $region32: #{tpu_custom_call.1} parent=1 // pred_region
      _
    $region33: #{tpu_custom_call.1} parent=1 // pred_fallthru
      _
    // Predicated region
    $region34: #{tpu_custom_call.1} parent=1 // pred_check
      _
    $region35: #{tpu_custom_call.1} parent=1 // pred_check_branch
      %157 = sbr.rel (0) target = $region37
    $region36: #{tpu_custom_call.1} parent=1 // pred_region
      _
    $region37: #{tpu_custom_call.1} parent=1 // pred_fallthru
      _
    %158 = vsyncpa [#allocation3], 1
    %159 = vsyncpa [#allocation4], 1

</llo_original>
